<compile_context>
chip_gen: v6e
topology: v6e:2x2x1
jax: 0.10.0
libtpu: 0.0.40
codegen_flags: <defaults>
</compile_context>

<pallas_src>
import functools
import math

import jax
import jax.numpy as jnp
from jax import lax
from jax.experimental import pallas as pl
from jax.experimental.pallas import tpu as pltpu


# ----------------------------------------------------------------------------
# Tile helper
# ----------------------------------------------------------------------------
def _pick_tile(dim, target, align):
    """Largest tile <= target that is a multiple of `align` and divides `dim`;
    falls back to the full dim (full extent is always a legal BlockSpec dim)."""
    if dim <= target:
        return dim
    t = (target // align) * align
    while t >= align:
        if dim % t == 0:
            return t
        t -= align
    return dim


# ----------------------------------------------------------------------------
# Tiled matmul kernel (used for the fused QKV projection and output projection)
# ----------------------------------------------------------------------------
def _matmul_kernel(a_ref, b_ref, o_ref, acc_ref):
    @pl.when(pl.program_id(2) == 0)
    def _():
        acc_ref[...] = jnp.zeros_like(acc_ref)

    acc_ref[...] += jnp.dot(a_ref[...], b_ref[...],
                            preferred_element_type=jnp.float32)

    @pl.when(pl.program_id(2) == pl.num_programs(2) - 1)
    def _():
        o_ref[...] = acc_ref[...].astype(o_ref.dtype)


def matmul(a, b, *, tm=256, tn=256, tk=512):
    """a: (M, K); b: (K, N) -> (M, N). K-tiled with f32 accumulator scratch."""
    M, K = a.shape
    K2, N = b.shape
    assert K == K2
    tm = _pick_tile(M, tm, 8)
    tn = _pick_tile(N, tn, 128)
    tk = _pick_tile(K, tk, 128)
    grid = (M // tm, N // tn, K // tk)
    # NOTE: at real Llama sizes also set vmem_limit_bytes in CompilerParams;
    # defaults are ample for these toy shapes.
    return pl.pallas_call(
        _matmul_kernel,
        out_shape=jax.ShapeDtypeStruct((M, N), a.dtype),
        grid_spec=pltpu.PrefetchScalarGridSpec(
            num_scalar_prefetch=0,
            grid=grid,
            in_specs=[
                pl.BlockSpec((tm, tk), lambda i, j, k: (i, k)),
                pl.BlockSpec((tk, tn), lambda i, j, k: (k, j)),
            ],
            out_specs=pl.BlockSpec((tm, tn), lambda i, j, k: (i, j)),
            scratch_shapes=[pltpu.VMEM((tm, tn), jnp.float32)],
        ),
        compiler_params=pltpu.CompilerParams(
            dimension_semantics=("parallel", "parallel", "arbitrary")),
    )(a, b)


# ----------------------------------------------------------------------------
# Flash-style attention kernel (online softmax, GQA via kv index_map)
# ----------------------------------------------------------------------------
def _attn_kernel(q_ref, k_ref, v_ref, mask_ref, o_ref,
                 m_sc, l_sc, acc_sc, *, sm_scale):
    ki = pl.program_id(2)

    @pl.when(ki == 0)
    def _():
        m_sc[...] = jnp.full_like(m_sc, -jnp.inf)
        l_sc[...] = jnp.zeros_like(l_sc)
        acc_sc[...] = jnp.zeros_like(acc_sc)

    q = q_ref[...]          # (tq, hd)
    k = k_ref[...]          # (tkv, hd)
    v = v_ref[...]          # (tkv, hd)

    s = lax.dot_general(q, k, (((1,), (1,)), ((), ())),
                        preferred_element_type=jnp.float32)
    s = s * sm_scale + mask_ref[...]

    m_prev = m_sc[...]
    m_new = jnp.maximum(m_prev, s.max(axis=-1, keepdims=True))
    alpha = jnp.exp(m_prev - m_new)
    p = jnp.exp(s - m_new)
    l_sc[...] = alpha * l_sc[...] + p.sum(axis=-1, keepdims=True)
    acc_sc[...] = alpha * acc_sc[...] + jnp.dot(
        p.astype(v.dtype), v, preferred_element_type=jnp.float32)
    m_sc[...] = m_new

    @pl.when(ki == pl.num_programs(2) - 1)
    def _():
        o_ref[...] = (acc_sc[...] / l_sc[...]).astype(o_ref.dtype)


def flash_attention(q, k, v, mask, *, n_rep, sm_scale, tq=256, tkv=256):
    """q: (B*nh, T, hd); k, v: (B*nkv, T, hd); mask: (T, T) additive."""
    BH, T, hd = q.shape
    tq = _pick_tile(T, tq, 8)
    tkv = _pick_tile(T, tkv, 128)
    grid = (BH, T // tq, T // tkv)
    kernel = functools.partial(_attn_kernel, sm_scale=sm_scale)
    return pl.pallas_call(
        kernel,
        out_shape=jax.ShapeDtypeStruct((BH, T, hd), q.dtype),
        grid_spec=pltpu.PrefetchScalarGridSpec(
            num_scalar_prefetch=0,
            grid=grid,
            in_specs=[
                pl.BlockSpec((None, tq, hd), lambda b, qi, ki: (b, qi, 0)),
                pl.BlockSpec((None, tkv, hd),
                             lambda b, qi, ki: (b // n_rep, ki, 0)),
                pl.BlockSpec((None, tkv, hd),
                             lambda b, qi, ki: (b // n_rep, ki, 0)),
                pl.BlockSpec((tq, tkv), lambda b, qi, ki: (qi, ki)),
            ],
            out_specs=pl.BlockSpec((None, tq, hd), lambda b, qi, ki: (b, qi, 0)),
            scratch_shapes=[
                pltpu.VMEM((tq, 1), jnp.float32),    # running max
                pltpu.VMEM((tq, 1), jnp.float32),    # running denom
                pltpu.VMEM((tq, hd), jnp.float32),   # output accumulator
            ],
        ),
        compiler_params=pltpu.CompilerParams(
            dimension_semantics=("parallel", "parallel", "arbitrary")),
    )(q, k, v, mask)


# ----------------------------------------------------------------------------
# Rotary embedding (wrapper-level, identical formula to the PyTorch helper)
# ----------------------------------------------------------------------------
def apply_rotary_emb(x, freqs_cis):
    """x: (B, T, H, hd); freqs_cis: (T, hd//2, 2) with [...,0]=cos, [...,1]=sin."""
    B, T, H, hd = x.shape
    xs = x.astype(jnp.float32).reshape(B, T, H, hd // 2, 2)
    fc = freqs_cis.reshape(1, T, 1, hd // 2, 2)
    out = jnp.stack(
        [xs[..., 0] * fc[..., 0] - xs[..., 1] * fc[..., 1],
         xs[..., 1] * fc[..., 0] + xs[..., 0] * fc[..., 1]],
        axis=-1)
    return out.reshape(B, T, H, hd).astype(x.dtype)


# ----------------------------------------------------------------------------
# Full Attention forward (matches Attention.forward with cache=None)
# ----------------------------------------------------------------------------
def attention_forward(x, wq, wk, wv, wo, freqs_cis, mask, *,
                      n_heads, n_kv_heads, start_pos=0):
    B, T, D = x.shape
    hd = D // n_heads
    n_rep = n_heads // n_kv_heads
    M = B * T
    del start_pos  # cache is None in the reference module; nothing to offset

    if mask is None:
        mask = jnp.zeros((T, T), dtype=jnp.float32)
    mask = mask.astype(jnp.float32)

    # Fused QKV projection: one weight stream / one MXU matmul per x tile.
    wqkv = jnp.concatenate([wq, wk, wv], axis=1)        # (D, (nh + 2*nkv)*hd)
    qkv = matmul(x.reshape(M, D), wqkv)
    q_sz = n_heads * hd
    kv_sz = n_kv_heads * hd
    xq = qkv[:, :q_sz].reshape(B, T, n_heads, hd)
    xk = qkv[:, q_sz:q_sz + kv_sz].reshape(B, T, n_kv_heads, hd)
    xv = qkv[:, q_sz + kv_sz:].reshape(B, T, n_kv_heads, hd)

    # TODO(synk): RoPE is applied here in plain JAX (cheap elementwise vs the
    # matmuls); fusing it into the QKV kernel would require in-kernel
    # even/odd pair interleaving on the lane axis.
    xq = apply_rotary_emb(xq, freqs_cis)
    xk = apply_rotary_emb(xk, freqs_cis)

    # Flatten heads. GQA (repeat_kv) handled inside the attention kernel via
    # the kv index_map (b // n_rep) -- no repeated-KV materialisation.
    qf = xq.transpose(0, 2, 1, 3).reshape(B * n_heads, T, hd)
    kf = xk.transpose(0, 2, 1, 3).reshape(B * n_kv_heads, T, hd)
    vf = xv.transpose(0, 2, 1, 3).reshape(B * n_kv_heads, T, hd)

    attn = flash_attention(qf, kf, vf, mask, n_rep=n_rep,
                           sm_scale=1.0 / math.sqrt(hd))
    attn = attn.reshape(B, n_heads, T, hd).transpose(0, 2, 1, 3).reshape(M, D)

    out = matmul(attn, wo)
    return out.reshape(B, T, D)


# ----------------------------------------------------------------------------
# Pure-JAX reference (mirrors the PyTorch forward)
# ----------------------------------------------------------------------------
def _reference(x, wq, wk, wv, wo, freqs_cis, mask, *, n_heads, n_kv_heads):
    B, T, D = x.shape
    hd = D // n_heads
    n_rep = n_heads // n_kv_heads
    hp = lax.Precision.HIGHEST
    xq = jnp.einsum('btd,dh->bth', x, wq, precision=hp).reshape(B, T, n_heads, hd)
    xk = jnp.einsum('btd,dh->bth', x, wk, precision=hp).reshape(B, T, n_kv_heads, hd)
    xv = jnp.einsum('btd,dh->bth', x, wv, precision=hp).reshape(B, T, n_kv_heads, hd)
    xq = apply_rotary_emb(xq, freqs_cis)
    xk = apply_rotary_emb(xk, freqs_cis)
    xk = jnp.repeat(xk, n_rep, axis=2)
    xv = jnp.repeat(xv, n_rep, axis=2)
    q = xq.transpose(0, 2, 1, 3)
    k = xk.transpose(0, 2, 1, 3)
    v = xv.transpose(0, 2, 1, 3)
    scores = jnp.einsum('bhqd,bhkd->bhqk', q, k, precision=hp) / math.sqrt(hd)
    if mask is not None:
        scores = scores + mask
    probs = jax.nn.softmax(scores.astype(jnp.float32), axis=-1).astype(q.dtype)
    out = jnp.einsum('bhqk,bhkd->bhqd', probs, v, precision=hp)
    out = out.transpose(0, 2, 1, 3).reshape(B, T, n_heads * hd)
    return jnp.einsum('btd,de->bte', out, wo, precision=hp)


if __name__ == "__main__":
    # Small config consistent with the module: dim=128, n_heads=4,
    # n_kv_heads=2 (GQA, n_rep=2), head_dim=32, batch=2, seq=8.
    dim = 128
    n_heads = 4
    n_kv_heads = 2
    head_dim = dim // n_heads
    B, T = 2, 8
    theta = 500000.0

    key = jax.random.PRNGKey(0)
    kx, kq, kk, kv, ko = jax.random.split(key, 5)
    x = jax.random.normal(kx, (B, T, dim), dtype=jnp.float32)
    bound = 1.0 / math.sqrt(dim)
    wq = jax.random.uniform(kq, (dim, n_heads * head_dim), jnp.float32, -bound, bound)
    wk = jax.random.uniform(kk, (dim, n_kv_heads * head_dim), jnp.float32, -bound, bound)
    wv = jax.random.uniform(kv, (dim, n_kv_heads * head_dim), jnp.float32, -bound, bound)
    wo = jax.random.uniform(ko, (n_heads * head_dim, dim), jnp.float32, -bound, bound)

    # Rotary table: (T, head_dim//2, 2) with cos/sin pairs.
    inv_freq = 1.0 / (theta ** (jnp.arange(0, head_dim, 2, dtype=jnp.float32) / head_dim))
    angles = jnp.outer(jnp.arange(T, dtype=jnp.float32), inv_freq)
    freqs_cis = jnp.stack([jnp.cos(angles), jnp.sin(angles)], axis=-1)

    # Causal additive mask (T, T).
    row = jnp.arange(T)[:, None]
    col = jnp.arange(T)[None, :]
    mask = jnp.where(col > row, -jnp.inf, 0.0).astype(jnp.float32)

    out = attention_forward(x, wq, wk, wv, wo, freqs_cis, mask,
                            n_heads=n_heads, n_kv_heads=n_kv_heads, start_pos=0)
    out = jax.block_until_ready(out)

    ref = _reference(x, wq, wk, wv, wo, freqs_cis, mask,
                     n_heads=n_heads, n_kv_heads=n_kv_heads)
    assert out.shape == (B, T, dim)
    assert jnp.allclose(out, ref, atol=1e-4, rtol=1e-4), "mismatch vs reference"
    print("KERNEL_OK")
</pallas_src>

<mosaic_0001>
module attributes {stable_mosaic.version = 11 : i64} {
  func.func @_matmul_kernel(%arg0: i32, %arg1: i32, %arg2: i32, %arg3: memref<16x128xf32, #tpu.memory_space<vmem>>, %arg4: memref<128x256xf32, #tpu.memory_space<vmem>>, %arg5: memref<16x256xf32, #tpu.memory_space<vmem>>, %arg6: memref<16x256xf32, #tpu.memory_space<vmem>>) attributes {dimension_semantics = [#tpu.dimension_semantics<parallel>, #tpu.dimension_semantics<parallel>, #tpu.dimension_semantics<arbitrary>], iteration_bounds = array<i64: 1, 1, 1>, scalar_prefetch = 0 : i64, scratch_operands = 1 : i64, tpu.core_type = #tpu.core_type<tc>, window_params = [{transform_indices = @transform_0, window_bounds = array<i64: 16, 128>}, {transform_indices = @transform_1, window_bounds = array<i64: 128, 256>}, {transform_indices = @transform_2, window_bounds = array<i64: 16, 256>}]} {
    %c0_i32 = arith.constant 0 : i32
    %0 = arith.cmpi eq, %arg2, %c0_i32 : i32
    %1 = arith.extui %0 : i1 to i32
    %c0_i32_0 = arith.constant 0 : i32
    %2 = arith.cmpi ne, %1, %c0_i32_0 : i32
    scf.if %2 {
      %cst_10 = arith.constant 0.000000e+00 : f32
      %12 = vector.broadcast %cst_10 : f32 to vector<16x256xf32>
      %c0_11 = arith.constant 0 : index
      %c0_12 = arith.constant 0 : index
      %13 = vector.load %arg6[%c0_11, %c0_12] : memref<16x256xf32, #tpu.memory_space<vmem>>, vector<16x256xf32>
      tpu.vector_store %arg6[%c0_11, %c0_12], %12 {strides = array<i32>} : memref<16x256xf32, #tpu.memory_space<vmem>>, vector<16x256xf32>,
    } else {
    }
    %c0 = arith.constant 0 : index
    %c0_1 = arith.constant 0 : index
    %3 = vector.load %arg6[%c0, %c0_1] : memref<16x256xf32, #tpu.memory_space<vmem>>, vector<16x256xf32>
    %c0_2 = arith.constant 0 : index
    %c0_3 = arith.constant 0 : index
    %4 = vector.load %arg3[%c0_2, %c0_3] : memref<16x128xf32, #tpu.memory_space<vmem>>, vector<16x128xf32>
    %c0_4 = arith.constant 0 : index
    %c0_5 = arith.constant 0 : index
    %5 = vector.load %arg4[%c0_4, %c0_5] : memref<128x256xf32, #tpu.memory_space<vmem>>, vector<128x256xf32>
    %cst = arith.constant dense<0.000000e+00> : vector<16x256xf32>
    %6 = tpu.matmul %4, %5, %cst {dimension_numbers = #tpu.dot_dimension_numbers<[1], [0], [0], [1], [0, 0, 1, 1], [], []>} : vector<16x128xf32>, vector<128x256xf32>, vector<16x256xf32> -> vector<16x256xf32>
    %7 = arith.addf %3, %6 : vector<16x256xf32>
    %c0_6 = arith.constant 0 : index
    %c0_7 = arith.constant 0 : index
    %8 = vector.load %arg6[%c0_6, %c0_7] : memref<16x256xf32, #tpu.memory_space<vmem>>, vector<16x256xf32>
    tpu.vector_store %arg6[%c0_6, %c0_7], %7 {strides = array<i32>} : memref<16x256xf32, #tpu.memory_space<vmem>>, vector<16x256xf32>,
    %c0_i32_8 = arith.constant 0 : i32
    %9 = arith.cmpi eq, %arg2, %c0_i32_8 : i32
    %10 = arith.extui %9 : i1 to i32
    %c0_i32_9 = arith.constant 0 : i32
    %11 = arith.cmpi ne, %10, %c0_i32_9 : i32
    scf.if %11 {
      %c0_10 = arith.constant 0 : index
      %c0_11 = arith.constant 0 : index
      %12 = vector.load %arg6[%c0_10, %c0_11] : memref<16x256xf32, #tpu.memory_space<vmem>>, vector<16x256xf32>
      %c0_12 = arith.constant 0 : index
      %c0_13 = arith.constant 0 : index
      %13 = vector.load %arg5[%c0_12, %c0_13] : memref<16x256xf32, #tpu.memory_space<vmem>>, vector<16x256xf32>
      tpu.vector_store %arg5[%c0_12, %c0_13], %12 {strides = array<i32>} : memref<16x256xf32, #tpu.memory_space<vmem>>, vector<16x256xf32>,
    } else {
    }
    return
  }
  func.func @transform_0(%arg0: i32, %arg1: i32, %arg2: i32) -> (i32, i32) {
    %c0_i32 = arith.constant 0 : i32
    return %arg0, %arg2 : i32, i32
  }
  func.func @transform_1(%arg0: i32, %arg1: i32, %arg2: i32) -> (i32, i32) {
    %c0_i32 = arith.constant 0 : i32
    return %arg2, %arg1 : i32, i32
  }
  func.func @transform_2(%arg0: i32, %arg1: i32, %arg2: i32) -> (i32, i32) {
    %c0_i32 = arith.constant 0 : i32
    return %arg0, %arg1 : i32, i32
  }
}

</mosaic_0001>

<llo_original>
// kernel: tpu_custom_call.1
$region0: #{tpu_custom_call.1}
  #allocation0 [shape = 'u32[]', space=smem, size = 0x4, offset = 0x4, fixed_abs, tag = 'smem constant byte address 0x4 - core index']
  #allocation1 [shape = 'u32[144,128]{1,0:T(1,128)}', space=vmem, size = 0x12000, scoped, tag = 'internal scratch']
  #allocation2 [shape = 'f32[16,256]{1,0:T(8,128)}', space=vmem, size = 0x4000, scoped, tag = 'scratch operand']
  %s0 = inlined_call_operand.hbm [shape: f32[16,128], index: 0, kind: input, shape index: {}]
  %s1 = inlined_call_operand.hbm [shape: f32[128,256], index: 1, kind: input, shape index: {}]
  %s2 = inlined_call_operand.hbm [shape: f32[16,256], index: 2, kind: output, shape index: {}]
  %s3 = sld [smem:[#allocation0]]
  $region34: #{tpu_custom_call.1} parent=0
    _
  %s5 = ssub.s32 1, %s3
  %s6 = scalar_select 0, %s5, %s3
  $region1: #{tpu_custom_call.1} parent=0
    #allocation3 [shape = 'u8[8192]{0}', space=vmem, size = 0x2000, scoped, tag = 'input window, operand 0, single buffered']
    #allocation4 [shape = 's32[1]{0}', space=sflag, size = 0x4, scoped, tag = 'scoped memory for tpu_custom_call.1']
    #allocation5 [shape = 's32[1]{0}', space=sflag, size = 0x4, scoped, tag = 'scoped memory for tpu_custom_call.1']
    #allocation6 [shape = 'u8[131072]{0}', space=vmem, size = 0x20000, scoped, tag = 'input window, operand 1, single buffered']
    #allocation7 [shape = 's32[1]{0}', space=sflag, size = 0x4, scoped, tag = 'scoped memory for tpu_custom_call.1']
    #allocation8 [shape = 'u8[16384]{0}', space=vmem, size = 0x4000, scoped, tag = 'output window, operand 0, single buffered']
    %7 = vsyncpa [#allocation4], 0
    %8 = vsyncpa [#allocation7], 0
    %9 = vsyncpa [#allocation5], 0
    // Predicated region
    $region2: #{tpu_custom_call.1} parent=1 // pred_check
      _
    $region3: #{tpu_custom_call.1} parent=1 // pred_check_branch
      %11 = sbr.rel (0) target = $region5
    $region4: #{tpu_custom_call.1} parent=1 // pred_region
      %s13 = ssub.s32 256, 256
      %14 = vsyncadd [#allocation4], %s13
      %s15 = sshll.u32 [#allocation3], 4
      %s16 = int_to_ptr.vmem [resolvable:$true] %s15
      %21 = dma.hbm_to_vmem [thread:$0]  %s0, 256, %s16, [#allocation4], 128, 128, 8
    $region5: #{tpu_custom_call.1} parent=1 // pred_fallthru
      _
    // Predicated region
    $region6: #{tpu_custom_call.1} parent=1 // pred_check
      _
    $region7: #{tpu_custom_call.1} parent=1 // pred_check_branch
      %23 = sbr.rel (0) target = $region9
    $region8: #{tpu_custom_call.1} parent=1 // pred_region
      %s25 = ssub.s32 4096, 4096
      %26 = vsyncadd [#allocation7], %s25
      %s27 = sshll.u32 [#allocation6], 4
      %s28 = int_to_ptr.vmem [resolvable:$true] %s27
      %33 = dma.hbm_to_vmem [thread:$0]  %s1, 4096, %s28, [#allocation7], 256, 256, 16
    $region9: #{tpu_custom_call.1} parent=1 // pred_fallthru
      _
    // Predicated region
    $region10: #{tpu_custom_call.1} parent=1 // pred_check
      _
    $region11: #{tpu_custom_call.1} parent=1 // pred_check_branch
      %35 = sbr.rel (0) target = $region13
    $region12: #{tpu_custom_call.1} parent=1 // pred_region
      %36 = dma.done [#allocation4], 256
    $region13: #{tpu_custom_call.1} parent=1 // pred_fallthru
      _
    // Predicated region
    $region14: #{tpu_custom_call.1} parent=1 // pred_check
      _
    $region15: #{tpu_custom_call.1} parent=1 // pred_check_branch
      %38 = sbr.rel (0) target = $region17
    $region16: #{tpu_custom_call.1} parent=1 // pred_region
      %39 = dma.done [#allocation7], 4096
    $region17: #{tpu_custom_call.1} parent=1 // pred_fallthru
      _
    %p40 = scmp.eq.s32.totalorder 0, 0
    // Predicated region
    $region18: #{tpu_custom_call.1} parent=1 // pred_check
      %p41 = pneg %p40
    $region19: #{tpu_custom_call.1} parent=1 // pred_check_branch
      %43 = sbr.rel (%p41) target = $region21
    $region20: #{tpu_custom_call.1} parent=1 // pred_region
      %44 = vst [vmem:[#allocation2] sm:$0xff] 0.0
      %45 = vst [vmem:[#allocation2 + $0x8] sm:$0xff] 0.0
      %46 = vst [vmem:[#allocation2 + $0x10] sm:$0xff] 0.0
      %47 = vst [vmem:[#allocation2 + $0x18] sm:$0xff] 0.0
    $region21: #{tpu_custom_call.1} parent=1 // pred_fallthru
      _
    %v48 = vld [vmem:[#allocation2] sm:$0xff]
    %v49 = vld [vmem:[#allocation2 + $0x8] sm:$0xff]
    %v50 = vld [vmem:[#allocation2 + $0x10] sm:$0xff]
    %v51 = vld [vmem:[#allocation2 + $0x18] sm:$0xff]
    %v52 = vld [vmem:[#allocation3] sm:$0xff]
    %v53 = vld [vmem:[#allocation3 + $0x8] sm:$0xff]
    %v54 = vld [vmem:[#allocation6] sm:$0xff]
    %v55 = vld [vmem:[#allocation6 + $0x8] sm:$0xff]
    %v56 = vld [vmem:[#allocation6 + $0x10] sm:$0xff]
    %v57 = vld [vmem:[#allocation6 + $0x18] sm:$0xff]
    %v58 = vld [vmem:[#allocation6 + $0x20] sm:$0xff]
    %v59 = vld [vmem:[#allocation6 + $0x28] sm:$0xff]
    %v60 = vld [vmem:[#allocation6 + $0x30] sm:$0xff]
    %v61 = vld [vmem:[#allocation6 + $0x38] sm:$0xff]
    %v62 = vld [vmem:[#allocation6 + $0x40] sm:$0xff]
    %v63 = vld [vmem:[#allocation6 + $0x48] sm:$0xff]
    %v64 = vld [vmem:[#allocation6 + $0x50] sm:$0xff]
    %v65 = vld [vmem:[#allocation6 + $0x58] sm:$0xff]
    %v66 = vld [vmem:[#allocation6 + $0x60] sm:$0xff]
    %v67 = vld [vmem:[#allocation6 + $0x68] sm:$0xff]
    %v68 = vld [vmem:[#allocation6 + $0x70] sm:$0xff]
    %v69 = vld [vmem:[#allocation6 + $0x78] sm:$0xff]
    %v70 = vld [vmem:[#allocation6 + $0x80] sm:$0xff]
    %v71 = vld [vmem:[#allocation6 + $0x88] sm:$0xff]
    %v72 = vld [vmem:[#allocation6 + $0x90] sm:$0xff]
    %v73 = vld [vmem:[#allocation6 + $0x98] sm:$0xff]
    %v74 = vld [vmem:[#allocation6 + $0xa0] sm:$0xff]
    %v75 = vld [vmem:[#allocation6 + $0xa8] sm:$0xff]
    %v76 = vld [vmem:[#allocation6 + $0xb0] sm:$0xff]
    %v77 = vld [vmem:[#allocation6 + $0xb8] sm:$0xff]
    %v78 = vld [vmem:[#allocation6 + $0xc0] sm:$0xff]
    %v79 = vld [vmem:[#allocation6 + $0xc8] sm:$0xff]
    %v80 = vld [vmem:[#allocation6 + $0xd0] sm:$0xff]
    %v81 = vld [vmem:[#allocation6 + $0xd8] sm:$0xff]
    %v82 = vld [vmem:[#allocation6 + $0xe0] sm:$0xff]
    %v83 = vld [vmem:[#allocation6 + $0xe8] sm:$0xff]
    %v84 = vld [vmem:[#allocation6 + $0xf0] sm:$0xff]
    %v85 = vld [vmem:[#allocation6 + $0xf8] sm:$0xff]
    %86 = vmatprep.subr.mxu0 %v85
    %87 = vmatpush1.msra.mxu0 %v84
    %88 = vmatprep.subr.mxu0 %v83
    %89 = vmatpush1.msra.mxu0 %v82
    %90 = vmatprep.subr.mxu0 %v81
    %91 = vmatpush1.msra.mxu0 %v80
    %92 = vmatprep.subr.mxu0 %v79
    %93 = vmatpush1.msra.mxu0 %v78
    %94 = vmatprep.subr.mxu0 %v77
    %95 = vmatpush1.msra.mxu0 %v76
    %96 = vmatprep.subr.mxu0 %v75
    %97 = vmatpush1.msra.mxu0 %v74
    %98 = vmatprep.subr.mxu0 %v73
    %99 = vmatpush1.msra.mxu0 %v72
    %100 = vmatprep.subr.mxu0 %v71
    %101 = vmatpush1.msra.mxu0 %v70
    %102 = vmatprep.subr.mxu0 %v69
    %103 = vmatpush1.msra.mxu0 %v68
    %104 = vmatprep.subr.mxu0 %v67
    %105 = vmatpush1.msra.mxu0 %v66
    %106 = vmatprep.subr.mxu0 %v65
    %107 = vmatpush1.msra.mxu0 %v64
    %108 = vmatprep.subr.mxu0 %v63
    %109 = vmatpush1.msra.mxu0 %v62
    %110 = vmatprep.subr.mxu0 %v61
    %111 = vmatpush1.msra.mxu0 %v60
    %112 = vmatprep.subr.mxu0 %v59
    %113 = vmatpush1.msra.mxu0 %v58
    %114 = vmatprep.subr.mxu0 %v57
    %115 = vmatpush1.msra.mxu0 %v56
    %116 = vmatprep.subr.mxu0 %v55
    %117 = vmatpush1.msra.mxu0 %v54
    %118 = vmatprep.subr.mxu0 0.0
    %119 = vmatpush2.msra.mxu0 0.0
    %120 = vmatprep.subr.mxu0 0.0
    %121 = vmatpush2.msra.mxu0 0.0
    %122 = vmatprep.subr.mxu0 0.0
    %123 = vmatpush2.msra.mxu0 0.0
    %124 = vmatprep.subr.mxu0 0.0
    %125 = vmatpush2.msra.mxu0 0.0
    %126 = vmatprep.subr.mxu0 0.0
    %127 = vmatpush2.msra.mxu0 0.0
    %128 = vmatprep.subr.mxu0 0.0
    %129 = vmatpush2.msra.mxu0 0.0
    %130 = vmatprep.subr.mxu0 0.0
    %131 = vmatpush2.msra.mxu0 0.0
    %132 = vmatprep.subr.mxu0 0.0
    %133 = vmatpush2.msra.mxu0 0.0
    %134 = vmatprep.subr.mxu0 0.0
    %135 = vmatpush2.msra.mxu0 0.0
    %136 = vmatprep.subr.mxu0 0.0
    %137 = vmatpush2.msra.mxu0 0.0
    %138 = vmatprep.subr.mxu0 0.0
    %139 = vmatpush2.msra.mxu0 0.0
    %140 = vmatprep.subr.mxu0 0.0
    %141 = vmatpush2.msra.mxu0 0.0
    %142 = vmatprep.subr.mxu0 0.0
    %143 = vmatpush2.msra.mxu0 0.0
    %144 = vmatprep.subr.mxu0 0.0
    %145 = vmatpush2.msra.mxu0 0.0
    %146 = vmatprep.subr.mxu0 0.0
    %147 = vmatpush2.msra.mxu0 0.0
    %148 = vmatprep.subr.mxu0 0.0
    %149 = vmatpush2.msra.mxu0 0.0
    %150 = vmatprep.mubr.f32.mxu0 0.0
    %151 = vmatmul.mubr.f32.gmra.mxu0 %v52
    %v152 = vpop.f32.mrf.mxu0
    %v153 = vadd.f32 0.0, %v152
    %v154 = vpop.f32.mrf.mxu0
    %v155 = vadd.f32 0.0, %v154
    %156 = vmatprep.mubr.f32.mxu0 0.0
    %157 = vmatmul.mubr.f32.gmra.mxu0 %v53
    %v158 = vpop.f32.mrf.mxu0
    %v159 = vadd.f32 0.0, %v158
    %v160 = vpop.f32.mrf.mxu0
    %v161 = vadd.f32 0.0, %v160
    %162 = vdwg.mxu0
    %v163 = vadd.f32 %v48, %v153
    %v164 = vadd.f32 %v49, %v155
    %v165 = vadd.f32 %v50, %v159
    %v166 = vadd.f32 %v51, %v161
    %167 = vst [vmem:[#allocation2] sm:$0xff] %v163
    %168 = vst [vmem:[#allocation2 + $0x8] sm:$0xff] %v164
    %169 = vst [vmem:[#allocation2 + $0x10] sm:$0xff] %v165
    %170 = vst [vmem:[#allocation2 + $0x18] sm:$0xff] %v166
    // Predicated region
    $region22: #{tpu_custom_call.1} parent=1 // pred_check
      %p171 = pneg %p40
    $region23: #{tpu_custom_call.1} parent=1 // pred_check_branch
      %173 = sbr.rel (%p171) target = $region25
    $region24: #{tpu_custom_call.1} parent=1 // pred_region
      %v174 = vld [vmem:[#allocation2] sm:$0xff]
      %v175 = vld [vmem:[#allocation2 + $0x8] sm:$0xff]
      %v176 = vld [vmem:[#allocation2 + $0x10] sm:$0xff]
      %v177 = vld [vmem:[#allocation2 + $0x18] sm:$0xff]
      %178 = vst [vmem:[#allocation8] sm:$0xff] %v174
      %179 = vst [vmem:[#allocation8 + $0x8] sm:$0xff] %v175
      %180 = vst [vmem:[#allocation8 + $0x10] sm:$0xff] %v176
      %181 = vst [vmem:[#allocation8 + $0x18] sm:$0xff] %v177
    $region25: #{tpu_custom_call.1} parent=1 // pred_fallthru
      _
    // Predicated region
    $region26: #{tpu_custom_call.1} parent=1 // pred_check
      _
    $region27: #{tpu_custom_call.1} parent=1 // pred_check_branch
      %183 = sbr.rel (0) target = $region29
    $region28: #{tpu_custom_call.1} parent=1 // pred_region
      %s185 = ssub.s32 512, 512
      %186 = vsyncadd [#allocation5], %s185
      %s187 = sshll.u32 [#allocation8], 4
      %s188 = int_to_ptr.vmem [resolvable:$true] %s187
      %193 = dma.vmem_to_hbm [thread:$0]  %s188, 512, %s2, [#allocation5], 256, 256, 16
    $region29: #{tpu_custom_call.1} parent=1 // pred_fallthru
      _
    // Predicated region
    $region30: #{tpu_custom_call.1} parent=1 // pred_check
      _
    $region31: #{tpu_custom_call.1} parent=1 // pred_check_branch
      %195 = sbr.rel (0) target = $region33
    $region32: #{tpu_custom_call.1} parent=1 // pred_region
      %196 = dma.done [#allocation5], 512
    $region33: #{tpu_custom_call.1} parent=1 // pred_fallthru
      _
    %197 = vsyncpa [#allocation4], 1
    %198 = vsyncpa [#allocation7], 1
    %199 = vsyncpa [#allocation5], 1

</llo_original>
